<compile_context>
chip_gen: v7x
topology: tpu7x:2x2x1
jax: 0.10.0
libtpu: 0.0.40
codegen_flags: <defaults>
</compile_context>

<pallas_src>
import numpy as np
import jax
import jax.numpy as jnp
from jax.experimental import pallas as pl
from jax.experimental.pallas import tpu as pltpu

NUM_CHANNELS = 506  # fixed by the module (ablation_maps entries are length-506)


def _make_ablation_mask(ablate_regions, num_regions=4, seed=0):
    """Deterministically synthesize region maps (in place of ablation_maps.npy)
    and AND the selected ones together, exactly like AblateChannels.__init__."""
    rng = np.random.RandomState(seed)
    region_maps = {
        f"region_{i}": rng.rand(NUM_CHANNELS) > 0.3 for i in range(num_regions)
    }
    mask = np.ones(NUM_CHANNELS) > 0
    for region in ablate_regions:
        mask = mask & region_maps[region]
    return mask  # bool (506,)


def _ablate_kernel(x_ref, m_ref, o_ref):
    # x_ref: (TM, C) tile of rows, m_ref: (1, C) 0/1 mask; broadcast multiply.
    o_ref[...] = x_ref[...] * m_ref[...]


def _default_tile_rows():
    """Generation-aware row tile: 2048 on v6e/v7x (higher HBM BW -> per-step
    overhead matters more), 1024 on v5e / unknown (16 MiB scoped-VMEM default)."""
    try:
        kind = jax.devices()[0].device_kind.lower()
    except Exception:
        kind = ""
    if "v5 lite" in kind or "v5e" in kind or "v5lite" in kind:
        return 1024
    return 2048


def _sublane_multiple(dtype):
    """Sublane rounding unit: 8 rows per vreg for 32-bit, 16 for 16-bit, 32 for 8-bit."""
    itemsize = jnp.dtype(dtype).itemsize
    if itemsize >= 4:
        return 8
    if itemsize == 2:
        return 16
    return 32


# Device-resident mask cache: avoid a blocking host->device copy on every call.
_MASK_CACHE = {}


def _device_mask(mask, dtype, C):
    if isinstance(mask, jax.Array):
        return mask.astype(dtype).reshape(1, C)
    m = np.asarray(mask)
    key = (m.tobytes(), jnp.dtype(dtype).name, C)
    dev = _MASK_CACHE.get(key)
    if dev is None:
        dev = jax.device_put(jnp.asarray(m, dtype=dtype).reshape(1, C))
        _MASK_CACHE[key] = dev
    return dev


def ablate_channels(x, mask, *, tile_rows=None, donate_x=False):
    """x: (..., C) float array. mask: (C,) bool (numpy or jax). Returns x * mask.

    donate_x=True marks the output as aliasing x's buffer (useful for x = ablate(x)).
    """
    orig_shape = x.shape
    C = orig_shape[-1]
    rows = int(np.prod(orig_shape[:-1])) if len(orig_shape) > 1 else 1
    x2 = x.reshape(rows, C)  # contiguous leading-dim collapse: metadata-only under jit

    if tile_rows is None:
        tile_rows = _default_tile_rows()
    sub = _sublane_multiple(x.dtype)

    # Row-tile selection:
    #  * clamp to the array,
    #  * cap at ~rows/2 so the grid has >= 2 blocks (both TCs busy on v7x),
    #  * interior tiles rounded to the dtype's sublane multiple (ragged last
    #    grid block is handled by Pallas: OOB writes dropped -> safe for a
    #    purely elementwise kernel).
    tm = min(tile_rows, rows)
    half_cap = ((rows // 2) // sub) * sub
    if half_cap >= sub:
        tm = min(tm, half_cap)
    if tm < rows:
        tm = max(sub, (tm // sub) * sub)

    grid = (pl.cdiv(rows, tm),)

    itemsize = jnp.dtype(x.dtype).itemsize
    tile_bytes = tm * C * itemsize
    # double-buffered input + double-buffered output + mask, plus margin
    footprint = 4 * tile_bytes + C * itemsize
    vmem_limit = int(min(48 << 20, max(32 << 20, footprint + (8 << 20))))

    mask_arr = _device_mask(mask, x.dtype, C)

    cost = pl.CostEstimate(
        flops=rows * C,
        bytes_accessed=2 * rows * C * itemsize + C * itemsize,
        transcendentals=0,
    )

    out = pl.pallas_call(
        _ablate_kernel,
        out_shape=jax.ShapeDtypeStruct((rows, C), x.dtype),
        grid_spec=pltpu.PrefetchScalarGridSpec(
            num_scalar_prefetch=0,
            grid=grid,
            in_specs=[
                pl.BlockSpec((tm, C), lambda i: (i, 0)),
                # Constant block index -> mask DMA'd into VMEM exactly once.
                pl.BlockSpec((1, C), lambda i: (0, 0)),
            ],
            out_specs=pl.BlockSpec((tm, C), lambda i: (i, 0)),
        ),
        compiler_params=pltpu.CompilerParams(
            dimension_semantics=("parallel",),  # shards rows across TCs on v7x
            vmem_limit_bytes=vmem_limit,
        ),
        cost_estimate=cost,
        input_output_aliases={0: 0} if donate_x else {},
    )(x2, mask_arr)

    return out.reshape(orig_shape)


if __name__ == "__main__":
    key = jax.random.PRNGKey(0)
    ablate_regions = ["region_0", "region_2"]
    mask_bool = _make_ablation_mask(ablate_regions)
    mask_np = mask_bool.astype(np.float32)

    # Small example consistent with the module: batch=2, seq=8, channels=506.
    B, T = 2, 8
    x = jax.random.normal(key, (B, T, NUM_CHANNELS), dtype=jnp.float32)
    ref = np.asarray(x) * mask_np
    y = jax.block_until_ready(ablate_channels(x, mask_bool))
    np.testing.assert_allclose(np.asarray(y), ref, rtol=0, atol=0)

    # Ragged last block + donated output buffer (ref computed before donation).
    x2 = jax.random.normal(jax.random.PRNGKey(1), (3, 40, NUM_CHANNELS),
                           dtype=jnp.float32)
    ref2 = np.asarray(x2) * mask_np
    y2 = jax.block_until_ready(
        ablate_channels(x2, mask_bool, tile_rows=16, donate_x=True))
    np.testing.assert_allclose(np.asarray(y2), ref2, rtol=0, atol=0)

    # bf16 path exercises the dtype-aware (16-row) sublane rounding.
    x3 = jax.random.normal(jax.random.PRNGKey(2), (4, 24, NUM_CHANNELS),
                           dtype=jnp.bfloat16)
    ref3 = np.asarray(x3, dtype=np.float32) * mask_np
    y3 = jax.block_until_ready(ablate_channels(x3, mask_bool, tile_rows=16))
    np.testing.assert_allclose(np.asarray(y3, dtype=np.float32), ref3,
                               rtol=0, atol=0)

    print("KERNEL_OK")
</pallas_src>

<mosaic_0001>
module attributes {stable_mosaic.version = 11 : i64} {
  func.func @_ablate_kernel(%arg0: i32, %arg1: memref<8x506xf32, #tpu.memory_space<vmem>>, %arg2: memref<1x506xf32, #tpu.memory_space<vmem>>, %arg3: memref<8x506xf32, #tpu.memory_space<vmem>>) attributes {dimension_semantics = [#tpu.dimension_semantics<parallel>], iteration_bounds = array<i64: 2>, scalar_prefetch = 0 : i64, scratch_operands = 0 : i64, tpu.core_type = #tpu.core_type<tc>, window_params = [{transform_indices = @transform_0, window_bounds = array<i64: 8, 506>}, {pipeline_mode = #tpu.pipeline_mode<synchronous>, transform_indices = @transform_1, window_bounds = array<i64: 1, 506>}, {transform_indices = @transform_2, window_bounds = array<i64: 8, 506>}]} {
    %c0 = arith.constant 0 : index
    %c0_0 = arith.constant 0 : index
    %0 = vector.load %arg1[%c0, %c0_0] : memref<8x506xf32, #tpu.memory_space<vmem>>, vector<8x506xf32>
    %c0_1 = arith.constant 0 : index
    %c0_2 = arith.constant 0 : index
    %1 = vector.load %arg2[%c0_1, %c0_2] : memref<1x506xf32, #tpu.memory_space<vmem>>, vector<1x506xf32>
    %2 = vector.broadcast %1 : vector<1x506xf32> to vector<8x506xf32>
    %3 = arith.mulf %0, %2 : vector<8x506xf32>
    %c0_3 = arith.constant 0 : index
    %c0_4 = arith.constant 0 : index
    %4 = vector.load %arg3[%c0_3, %c0_4] : memref<8x506xf32, #tpu.memory_space<vmem>>, vector<8x506xf32>
    tpu.vector_store %arg3[%c0_3, %c0_4], %3 {strides = array<i32>} : memref<8x506xf32, #tpu.memory_space<vmem>>, vector<8x506xf32>,
    return
  }
  func.func @transform_0(%arg0: i32) -> (i32, i32) {
    %c0_i32 = arith.constant 0 : i32
    %c0_i32_0 = arith.constant 0 : i32
    return %arg0, %c0_i32 : i32, i32
  }
  func.func @transform_1(%arg0: i32) -> (i32, i32) {
    %c0_i32 = arith.constant 0 : i32
    %c0_i32_0 = arith.constant 0 : i32
    %c0_i32_1 = arith.constant 0 : i32
    return %c0_i32, %c0_i32_0 : i32, i32
  }
  func.func @transform_2(%arg0: i32) -> (i32, i32) {
    %c0_i32 = arith.constant 0 : i32
    %c0_i32_0 = arith.constant 0 : i32
    return %arg0, %c0_i32 : i32, i32
  }
}

</mosaic_0001>

<llo_original>
// kernel: tpu_custom_call.1
$region0: #{tpu_custom_call.1}
  #allocation0 [shape = 'u32[]', space=smem, size = 0x4, offset = 0x4, fixed_abs, tag = 'smem constant byte address 0x4 - core index']
  #allocation1 [shape = 'u32[144,128]{1,0:T(1,128)}', space=vmem, size = 0x12000, scoped, tag = 'internal scratch']
  %s0 = inlined_call_operand.hbm [shape: f32[16,506], index: 0, kind: input, shape index: {}]
  %s1 = inlined_call_operand.hbm [shape: f32[1,506], index: 1, kind: input, shape index: {}]
  %s2 = inlined_call_operand.hbm [shape: f32[16,506], index: 2, kind: output, shape index: {}]
  %s3 = sld [smem:[#allocation0]]
  $region49: #{tpu_custom_call.1} parent=0
    _
  %s5 = ssub.s32 1, %s3
  %s6 = scalar_select 0, %s5, %s3
  $region1: #{tpu_custom_call.1} parent=0
    #allocation2 [shape = 'u8[32768]{0}', space=vmem, size = 0x8000, scoped, tag = 'input window, operand 0']
    #allocation3 [shape = 's32[2]{0}', space=sflag, size = 0x8, scoped, tag = 'scoped memory for tpu_custom_call.1']
    #allocation4 [shape = 's32[2]{0}', space=sflag, size = 0x8, scoped, tag = 'scoped memory for tpu_custom_call.1']
    #allocation5 [shape = 'u8[2048]{0}', space=vmem, size = 0x800, scoped, tag = 'input window, operand 1, single buffered']
    #allocation6 [shape = 's32[1]{0}', space=sflag, size = 0x4, scoped, tag = 'scoped memory for tpu_custom_call.1']
    #allocation7 [shape = 'u8[32768]{0}', space=vmem, size = 0x8000, scoped, tag = 'output window, operand 0']
    %7 = vsyncpa [#allocation3], 0
    %s8 = scalar_lea.sflag [#allocation3], 1
    %9 = vsyncpa %s8, 0
    %10 = vsyncpa [#allocation6], 0
    %11 = vsyncpa [#allocation4], 0
    %s12 = scalar_lea.sflag [#allocation4], 1
    %13 = vsyncpa %s12, 0
    loop: start=0, step=1, limit=4
    $region2: #{tpu_custom_call.1} parent=1 // loop_pre_header
      _
    $region3: #{tpu_custom_call.1} parent=1 // loop_header
      %s15 = sphi 0, %s19
      %p16 = scmp.ge.s32.totalorder %s15, 4
      %s25 = sphi 0, %s27
      %s28 = sphi 0, %s25
      %s29 = sphi 0, %s28
      %s45 = sphi 0, %s29
      %s49 = sphi 0, %s49
      %s51 = sphi 0, %s49
      %s52 = sphi 0, %s51
      %s66 = sphi 0, %s52
      %s72 = sphi 0, %s74
      %s75 = sphi 0, %s72
      %s76 = sphi 0, %s75
      %s92 = sphi 0, %s76
    $region4: #{tpu_custom_call.1} parent=1 // loop_header_branch
      %18 = sbr.rel (%p16) target = $region8
    $region5: #{tpu_custom_call.1} parent=1 // loop_body
      %s20 = ssub.s32 %s15, 1
      %s21 = ssub.s32 %s15, 2
      %s22 = sadd.s32 %s15, 1
      %s23 = ssub.s32 %s15, %s22
      %p24 = scmp.eq.s32.totalorder %s23, 0
      %s26 = sadd.s32 %s25, 1
      %s27 = scalar_select %p24, %s25, %s26
      %p30 = pneg %p24
      %p31 = scmp.eq.s32.totalorder %s15, 1
      %p32 = por %p30, %p31
      %p33 = scmp.ne.s32.totalorder %s25, %s28
      %p34 = scmp.eq.s32.totalorder %s15, 0
      %p35 = por %p33, %p34
      %p36 = scmp.ne.s32.totalorder %s25, %s28
      %p37 = scmp.eq.s32.totalorder %s20, 1
      %p38 = por %p36, %p37
      %p39 = scmp.ne.s32.totalorder %s28, %s29
      %p40 = scmp.eq.s32.totalorder %s20, 0
      %p41 = por %p39, %p40
      %p42 = scmp.ne.s32.totalorder %s28, %s29
      %p43 = scmp.eq.s32.totalorder %s21, 1
      %p44 = por %p42, %p43
      %p46 = scmp.ne.s32.totalorder %s29, %s45
      %p47 = scmp.eq.s32.totalorder %s21, 0
      %p48 = por %p46, %p47
      %s50 = sadd.s32 %s49, 1
      %p53 = scmp.eq.s32.totalorder %s15, 1
      %p54 = scmp.ne.s32.totalorder %s49, %s51
      %p55 = scmp.eq.s32.totalorder %s15, 0
      %p56 = por %p54, %p55
      %p57 = scmp.ne.s32.totalorder %s49, %s51
      %p58 = scmp.eq.s32.totalorder %s20, 1
      %p59 = por %p57, %p58
      %p60 = scmp.ne.s32.totalorder %s51, %s52
      %p61 = scmp.eq.s32.totalorder %s20, 0
      %p62 = por %p60, %p61
      %p63 = scmp.ne.s32.totalorder %s51, %s52
      %p64 = scmp.eq.s32.totalorder %s21, 1
      %p65 = por %p63, %p64
      %p67 = scmp.ne.s32.totalorder %s52, %s66
      %p68 = scmp.eq.s32.totalorder %s21, 0
      %p69 = por %p67, %p68
      %s70 = ssub.s32 %s15, %s22
      %p71 = scmp.eq.s32.totalorder %s70, 0
      %s73 = sadd.s32 %s72, 1
      %s74 = scalar_select %p71, %s72, %s73
      %p77 = pneg %p71
      %p78 = scmp.eq.s32.totalorder %s15, 1
      %p79 = por %p77, %p78
      %p80 = scmp.ne.s32.totalorder %s72, %s75
      %p81 = scmp.eq.s32.totalorder %s15, 0
      %p82 = por %p80, %p81
      %p83 = scmp.ne.s32.totalorder %s72, %s75
      %p84 = scmp.eq.s32.totalorder %s20, 1
      %p85 = por %p83, %p84
      %p86 = scmp.ne.s32.totalorder %s75, %s76
      %p87 = scmp.eq.s32.totalorder %s20, 0
      %p88 = por %p86, %p87
      %p89 = scmp.ne.s32.totalorder %s75, %s76
      %p90 = scmp.eq.s32.totalorder %s21, 1
      %p91 = por %p89, %p90
      %p93 = scmp.ne.s32.totalorder %s76, %s92
      %p94 = scmp.eq.s32.totalorder %s21, 0
      %p95 = por %p93, %p94
      %p96 = scmp.le.s32.totalorder 1, %s15
      %p97 = scmp.lt.s32.totalorder %s15, 3
      %p98 = pnand %p96, %p97
      %p99 = pneg %p98
      // Predicated region
      $region9: #{tpu_custom_call.1} parent=5 // pred_check
        _
      $region10: #{tpu_custom_call.1} parent=5 // pred_check_branch
        %101 = sbr.rel (%p98) target = $region12
      $region11: #{tpu_custom_call.1} parent=5 // pred_region
        %s102 = ssub.s32 %s15, 1
        // Predicated region
        $region13: #{tpu_custom_call.1} parent=11 // pred_check
          %p103 = pneg %p62
        $region14: #{tpu_custom_call.1} parent=11 // pred_check_branch
          %105 = sbr.rel (%p103) target = $region16
        $region15: #{tpu_custom_call.1} parent=11 // pred_region
          %s107 = ssub.s32 64, 64
          %108 = vsyncadd [#allocation6], %s107
          %s110 = sshll.u32 [#allocation5], 4
          %s111 = int_to_ptr.vmem [resolvable:$true] %s110
          %113 = dma.hbm_to_vmem [thread:$0]  %s1, 64, %s111, [#allocation6]
        $region16: #{tpu_custom_call.1} parent=11 // pred_fallthru
          _
      $region12: #{tpu_custom_call.1} parent=5 // pred_fallthru
        _
      %p114 = scmp.lt.s32.totalorder %s15, 2
      // Predicated region
      $region17: #{tpu_custom_call.1} parent=5 // pred_check
        %p115 = pneg %p114
      $region18: #{tpu_custom_call.1} parent=5 // pred_check_branch
        %117 = sbr.rel (%p115) target = $region20
      $region19: #{tpu_custom_call.1} parent=5 // pred_region
        // Predicated region
        $region21: #{tpu_custom_call.1} parent=19 // pred_check
          %p118 = pneg %p35
        $region22: #{tpu_custom_call.1} parent=19 // pred_check_branch
          %120 = sbr.rel (%p118) target = $region24
        $region23: #{tpu_custom_call.1} parent=19 // pred_region
          %s121 = sand.u32 %s25, 1
          %s122 = scalar_lea.sflag [#allocation3], %s121
          %s123 = sand.u32 %s25, 1
          %s124 = smul.addr %s123, 32
          %s125 = scalar_lea.vmem [#allocation2], %s124
          %s127 = ssub.s32 512, 512
          %128 = vsyncadd %s122, %s127
          %s129 = smul.addr %s15, 4
          %s130 = smul.addr %s129, 128
          %s131 = scalar_lea.hbm %s0, %s130
          %s133 = sshll.u32 %s125, 4
          %s134 = int_to_ptr.vmem [resolvable:$true] %s133
          %136 = dma.hbm_to_vmem [thread:$0]  %s131, 512, %s134, %s122
        $region24: #{tpu_custom_call.1} parent=19 // pred_fallthru
          _
      $region20: #{tpu_custom_call.1} parent=5 // pred_fallthru
        _
      %p137 = scmp.le.s32.totalorder 1, %s15
      %p138 = scmp.lt.s32.totalorder %s15, 3
      %p139 = pnand %p137, %p138
      %p140 = pneg %p139
      // Predicated region
      $region25: #{tpu_custom_call.1} parent=5 // pred_check
        _
      $region26: #{tpu_custom_call.1} parent=5 // pred_check_branch
        %142 = sbr.rel (%p139) target = $region28
      $region27: #{tpu_custom_call.1} parent=5 // pred_region
        %s143 = ssub.s32 %s15, 1
        %s144 = sand.u32 %s28, 1
        %s145 = scalar_lea.sflag [#allocation3], %s144
        %s146 = sand.u32 %s28, 1
        %s147 = smul.addr %s146, 32
        %s148 = scalar_lea.vmem [#allocation2], %s147
        // Predicated region
        $region29: #{tpu_custom_call.1} parent=27 // pred_check
          %p149 = pneg %p41
        $region30: #{tpu_custom_call.1} parent=27 // pred_check_branch
          %151 = sbr.rel (%p149) target = $region32
        $region31: #{tpu_custom_call.1} parent=27 // pred_region
          %152 = dma.done %s145, 512
        $region32: #{tpu_custom_call.1} parent=27 // pred_fallthru
          _
        // Predicated region
        $region33: #{tpu_custom_call.1} parent=27 // pred_check
          %p153 = pneg %p62
        $region34: #{tpu_custom_call.1} parent=27 // pred_check_branch
          %155 = sbr.rel (%p153) target = $region36
        $region35: #{tpu_custom_call.1} parent=27 // pred_region
          %156 = dma.done [#allocation6], 64
        $region36: #{tpu_custom_call.1} parent=27 // pred_fallthru
          _
        %s157 = sand.u32 %s28, 1
        %s158 = scalar_lea.sflag [#allocation3], %s157
        %s159 = sand.u32 %s28, 1
        %s160 = smul.addr %s159, 32
        %s161 = scalar_lea.vmem [#allocation2], %s160
        %p162 = pneg %p41
        %p163 = pneg %p38
        %p164 = pneg %p62
        %p165 = pneg %p59
        %p166 = pneg %p88
        %p167 = pneg %p85
        %s168 = sand.u32 %s75, 1
        %s169 = scalar_lea.sflag [#allocation4], %s168
        %s170 = sand.u32 %s75, 1
        %s171 = smul.addr %s170, 32
        %s172 = scalar_lea.vmem [#allocation7], %s171
        %v173 = vld [vmem:[%s148] sm:$0xff]
        %v174 = vld [vmem:[%s148 + $0x8] sm:$0xff]
        %v175 = vld [vmem:[%s148 + $0x10] sm:$0xff]
        %v176 = vld [vmem:[%s148 + $0x18] sm:$0xff]
        %v177 = vld [vmem:[#allocation5] sm:$0xf]
        %v179 = vlaneseq
        %v180 = vshrl.u32 %v179, 7
        %v181 = vsub.s32 0, %v180
        %v182 = vrot.slane %v177, %v181
        %v183 = vlaneseq
        %v184 = vshrl.u32 %v183, 7
        %v185 = vsub.s32 1, %v184
        %v186 = vrot.slane %v177, %v185
        %v187 = vlaneseq
        %v188 = vshrl.u32 %v187, 7
        %v189 = vsub.s32 2, %v188
        %v190 = vrot.slane %v177, %v189
        %v191 = vlaneseq
        %v192 = vshrl.u32 %v191, 7
        %v193 = vsub.s32 3, %v192
        %v194 = vrot.slane %v177, %v193
        %v199 = vmul.f32 %v173, %v182
        %v200 = vmul.f32 %v174, %v186
        %v201 = vmul.f32 %v175, %v190
        %v202 = vmul.f32 %v176, %v194
        %203 = vst [vmem:[%s172] sm:$0xff] %v199
        %204 = vst [vmem:[%s172 + $0x8] sm:$0xff] %v200
        %205 = vst [vmem:[%s172 + $0x10] sm:$0xff] %v201
        %vm206 = vcmask 998400
        %207 = vst.msk [vmem:[%s172 + $0x18] sm:$0xff] %vm206, %v202
        %s208 = sand.u32 %s75, 1
        %s209 = scalar_lea.sflag [#allocation4], %s208
        %s210 = sand.u32 %s75, 1
        %s211 = smul.addr %s210, 32
        %s212 = scalar_lea.vmem [#allocation7], %s211
        // Predicated region
        $region37: #{tpu_custom_call.1} parent=27 // pred_check
          %p213 = pneg %p85
        $region38: #{tpu_custom_call.1} parent=27 // pred_check_branch
          %215 = sbr.rel (%p213) target = $region40
        $region39: #{tpu_custom_call.1} parent=27 // pred_region
          %s217 = ssub.s32 512, 512
          %218 = vsyncadd %s209, %s217
          %s219 = smul.addr %s20, 4
          %s220 = smul.addr %s219, 128
          %s221 = scalar_lea.hbm %s2, %s220
          %s223 = sshll.u32 %s212, 4
          %s224 = int_to_ptr.vmem [resolvable:$true] %s223
          %226 = dma.vmem_to_hbm [thread:$0]  %s224, 512, %s221, %s209
        $region40: #{tpu_custom_call.1} parent=27 // pred_fallthru
          _
      $region28: #{tpu_custom_call.1} parent=5 // pred_fallthru
        _
      %p227 = scmp.le.s32.totalorder 2, %s15
      // Predicated region
      $region41: #{tpu_custom_call.1} parent=5 // pred_check
        %p228 = pneg %p227
      $region42: #{tpu_custom_call.1} parent=5 // pred_check_branch
        %230 = sbr.rel (%p228) target = $region44
      $region43: #{tpu_custom_call.1} parent=5 // pred_region
        %s231 = ssub.s32 %s15, 2
        // Predicated region
        $region45: #{tpu_custom_call.1} parent=43 // pred_check
          %p232 = pneg %p91
        $region46: #{tpu_custom_call.1} parent=43 // pred_check_branch
          %234 = sbr.rel (%p232) target = $region48
        $region47: #{tpu_custom_call.1} parent=43 // pred_region
          %s235 = sand.u32 %s76, 1
          %s236 = scalar_lea.sflag [#allocation4], %s235
          %s237 = sand.u32 %s76, 1
          %s238 = smul.addr %s237, 32
          %s239 = scalar_lea.vmem [#allocation7], %s238
          %240 = dma.done %s236, 512
        $region48: #{tpu_custom_call.1} parent=43 // pred_fallthru
          _
      $region44: #{tpu_custom_call.1} parent=5 // pred_fallthru
        _
    $region6: #{tpu_custom_call.1} parent=1 // loop_footer
      %s19 = sadd.s32 1, %s15
    $region7: #{tpu_custom_call.1} parent=1 // loop_footer_branch
      %14 = sbr.rel target = $region3
    $region8: #{tpu_custom_call.1} parent=1 // loop_exit
      _
    %241 = vsyncpa [#allocation3], 1
    %s242 = scalar_lea.sflag [#allocation3], 1
    %243 = vsyncpa %s242, 1
    %244 = vsyncpa [#allocation6], 1
    %245 = vsyncpa [#allocation4], 1
    %s246 = scalar_lea.sflag [#allocation4], 1
    %247 = vsyncpa %s246, 1

</llo_original>
